<compile_context>
chip_gen: v5e
topology: v5e:2x2
jax: 0.10.0
libtpu: 0.0.40
codegen_flags: <defaults>
</compile_context>

<pallas_src>
import functools

import jax
import jax.numpy as jnp
from jax import lax
from jax.experimental import pallas as pl
from jax.experimental.pallas import tpu as pltpu

BLOCK_SIZE = 256   # max sequence length supported by the module's tril buffer
N_EMBD = 128
DROPOUT = 0.2      # inference mode -> identity


def _head_kernel(x_ref, wq_ref, wk_ref, wv_ref, o_ref):
    # x_ref:  (1, T, C)        one batch element
    # wq/wk/wv_ref: (C, H)     resident projection weights (torch weight^T)
    # o_ref:  (1, T, H)
    x = x_ref[0]                                   # (T, C)
    T = x.shape[0]
    H = wq_ref.shape[1]

    # Projections (f32 accumulation on the MXU).
    q = jnp.dot(x, wq_ref[...], preferred_element_type=jnp.float32)   # (T, H)
    k = jnp.dot(x, wk_ref[...], preferred_element_type=jnp.float32)   # (T, H)
    v = jnp.dot(x, wv_ref[...], preferred_element_type=jnp.float32)   # (T, H)

    # Scaled attention scores.
    scale = H ** (-0.5)
    s = jnp.dot(q, k.T, preferred_element_type=jnp.float32) * scale   # (T, T)

    # Causal (lower-triangular) mask, generated in-kernel (no tril buffer DMA).
    row = lax.broadcasted_iota(jnp.int32, (T, T), 0)
    col = lax.broadcasted_iota(jnp.int32, (T, T), 1)
    s = jnp.where(col <= row, s, -jnp.inf)

    # Numerically stable softmax along the key axis.
    m = jnp.max(s, axis=-1, keepdims=True)
    p = jnp.exp(s - m)
    l = jnp.sum(p, axis=-1, keepdims=True)
    wei = p / l

    # Dropout(p=0.2) in eval mode == identity.

    out = jnp.dot(wei.astype(v.dtype), v, preferred_element_type=jnp.float32)
    o_ref[0] = out.astype(o_ref.dtype)


@jax.jit
def head_pallas(x, wq, wk, wv):
    """Single-head causal self-attention.

    x:  (B, T, n_embd) float32, T <= 256
    wq, wk, wv: (n_embd, head_size)  (transposed torch nn.Linear weights)
    returns (B, T, head_size) float32
    """
    B, T, C = x.shape
    H = wq.shape[1]

    # Advisory cost hint for the XLA scheduler.
    flops = B * (3 * 2 * T * C * H + 2 * 2 * T * T * H)
    transcendentals = B * T * T
    bytes_accessed = (B * T * C + B * T * H + 3 * C * H) * 4
    cost = pl.CostEstimate(flops=flops, transcendentals=transcendentals,
                           bytes_accessed=bytes_accessed)

    return pl.pallas_call(
        _head_kernel,
        out_shape=jax.ShapeDtypeStruct((B, T, H), x.dtype),
        grid=(B,),
        in_specs=[
            pl.BlockSpec((1, T, C), lambda b: (b, 0, 0)),   # x, one batch row
            pl.BlockSpec((C, H), lambda b: (0, 0)),         # Wq (resident)
            pl.BlockSpec((C, H), lambda b: (0, 0)),         # Wk (resident)
            pl.BlockSpec((C, H), lambda b: (0, 0)),         # Wv (resident)
        ],
        out_specs=pl.BlockSpec((1, T, H), lambda b: (b, 0, 0)),
        compiler_params=pltpu.CompilerParams(
            dimension_semantics=("parallel",)),
        cost_estimate=cost,
    )(x, wq, wk, wv)


def _init_params(key, n_embd, head_size):
    """Mimic nn.Linear(bias=False) default init: U(-1/sqrt(fan_in), +)."""
    kq, kk, kv = jax.random.split(key, 3)
    lim = 1.0 / jnp.sqrt(n_embd)
    wq = jax.random.uniform(kq, (n_embd, head_size), jnp.float32, -lim, lim)
    wk = jax.random.uniform(kk, (n_embd, head_size), jnp.float32, -lim, lim)
    wv = jax.random.uniform(kv, (n_embd, head_size), jnp.float32, -lim, lim)
    return wq, wk, wv


if __name__ == "__main__":
    key = jax.random.PRNGKey(0)
    kx, kp = jax.random.split(key)

    batch, seq, head_size = 2, 8, 32
    assert seq <= BLOCK_SIZE
    x = jax.random.normal(kx, (batch, seq, N_EMBD), jnp.float32)
    wq, wk, wv = _init_params(kp, N_EMBD, head_size)

    y = head_pallas(x, wq, wk, wv)
    y = jax.block_until_ready(y)

    # Pure-JAX reference (eval-mode dropout == identity).
    q = x @ wq
    k = x @ wk
    v = x @ wv
    wei = (q @ jnp.swapaxes(k, -1, -2)) * (head_size ** -0.5)
    mask = jnp.tril(jnp.ones((seq, seq), dtype=bool))
    wei = jnp.where(mask[None, :, :], wei, -jnp.inf)
    wei = jax.nn.softmax(wei, axis=-1)
    ref = wei @ v

    assert y.shape == (batch, seq, head_size) and y.dtype == x.dtype
    assert jnp.allclose(y, ref, atol=1e-4, rtol=1e-4), "mismatch vs reference"

    print("KERNEL_OK")
</pallas_src>

<mosaic_0001>
module attributes {stable_mosaic.version = 11 : i64} {
  func.func @_head_kernel(%arg0: i32, %arg1: memref<1x8x128xf32, #tpu.memory_space<vmem>>, %arg2: memref<128x32xf32, #tpu.memory_space<vmem>>, %arg3: memref<128x32xf32, #tpu.memory_space<vmem>>, %arg4: memref<128x32xf32, #tpu.memory_space<vmem>>, %arg5: memref<1x8x32xf32, #tpu.memory_space<vmem>>) attributes {dimension_semantics = [#tpu.dimension_semantics<parallel>], iteration_bounds = array<i64: 2>, scalar_prefetch = 0 : i64, scratch_operands = 0 : i64, tpu.core_type = #tpu.core_type<tc>, window_params = [{transform_indices = @transform_0, window_bounds = array<i64: 1, 8, 128>}, {pipeline_mode = #tpu.pipeline_mode<synchronous>, transform_indices = @transform_1, window_bounds = array<i64: 128, 32>}, {pipeline_mode = #tpu.pipeline_mode<synchronous>, transform_indices = @transform_2, window_bounds = array<i64: 128, 32>}, {pipeline_mode = #tpu.pipeline_mode<synchronous>, transform_indices = @transform_3, window_bounds = array<i64: 128, 32>}, {transform_indices = @transform_4, window_bounds = array<i64: 1, 8, 32>}]} {
    %c0 = arith.constant 0 : index
    %c0_0 = arith.constant 0 : index
    %c0_1 = arith.constant 0 : index
    %0 = vector.load %arg1[%c0, %c0_0, %c0_1] : memref<1x8x128xf32, #tpu.memory_space<vmem>>, vector<1x8x128xf32>
    %1 = vector.shape_cast %0 : vector<1x8x128xf32> to vector<8x128xf32>
    %c0_2 = arith.constant 0 : index
    %c0_3 = arith.constant 0 : index
    %2 = vector.load %arg2[%c0_2, %c0_3] : memref<128x32xf32, #tpu.memory_space<vmem>>, vector<128x32xf32>
    %cst = arith.constant dense<0.000000e+00> : vector<8x32xf32>
    %3 = tpu.matmul %1, %2, %cst {dimension_numbers = #tpu.dot_dimension_numbers<[1], [0], [0], [1], [0, 0, 1, 1], [], []>} : vector<8x128xf32>, vector<128x32xf32>, vector<8x32xf32> -> vector<8x32xf32>
    %c0_4 = arith.constant 0 : index
    %c0_5 = arith.constant 0 : index
    %4 = vector.load %arg3[%c0_4, %c0_5] : memref<128x32xf32, #tpu.memory_space<vmem>>, vector<128x32xf32>
    %cst_6 = arith.constant dense<0.000000e+00> : vector<8x32xf32>
    %5 = tpu.matmul %1, %4, %cst_6 {dimension_numbers = #tpu.dot_dimension_numbers<[1], [0], [0], [1], [0, 0, 1, 1], [], []>} : vector<8x128xf32>, vector<128x32xf32>, vector<8x32xf32> -> vector<8x32xf32>
    %c0_7 = arith.constant 0 : index
    %c0_8 = arith.constant 0 : index
    %6 = vector.load %arg4[%c0_7, %c0_8] : memref<128x32xf32, #tpu.memory_space<vmem>>, vector<128x32xf32>
    %cst_9 = arith.constant dense<0.000000e+00> : vector<8x32xf32>
    %7 = tpu.matmul %1, %6, %cst_9 {dimension_numbers = #tpu.dot_dimension_numbers<[1], [0], [0], [1], [0, 0, 1, 1], [], []>} : vector<8x128xf32>, vector<128x32xf32>, vector<8x32xf32> -> vector<8x32xf32>
    %8 = tpu.transpose %5, [1, 0] : vector<8x32xf32> -> vector<32x8xf32>
    %cst_10 = arith.constant dense<0.000000e+00> : vector<8x8xf32>
    %9 = tpu.matmul %3, %8, %cst_10 {dimension_numbers = #tpu.dot_dimension_numbers<[1], [0], [0], [1], [0, 0, 1, 1], [], []>} : vector<8x32xf32>, vector<32x8xf32>, vector<8x8xf32> -> vector<8x8xf32>
    %cst_11 = arith.constant 0.176776692 : f32
    %10 = vector.broadcast %cst_11 : f32 to vector<8x8xf32>
    %11 = arith.mulf %9, %10 : vector<8x8xf32>
    %12 = tpu.iota {dimensions = array<i32: 0>} : vector<8x8xi32>
    %13 = tpu.iota {dimensions = array<i32: 1>} : vector<8x8xi32>
    %14 = arith.cmpi sle, %13, %12 : vector<8x8xi32>
    %cst_12 = arith.constant 0xFF800000 : f32
    %15 = vector.broadcast %cst_12 : f32 to vector<8x8xf32>
    %16 = arith.select %14, %11, %15 : vector<8x8xi1>, vector<8x8xf32>
    %cst_13 = arith.constant dense<0xFF800000> : vector<8xf32>
    %17 = vector.multi_reduction <maximumf>, %16, %cst_13 [1] : vector<8x8xf32> to vector<8xf32>
    %18 = vector.shape_cast %17 : vector<8xf32> to vector<8x1xf32>
    %19 = vector.broadcast %18 : vector<8x1xf32> to vector<8x8xf32>
    %20 = arith.subf %16, %19 : vector<8x8xf32>
    %21 = math.exp %20 : vector<8x8xf32>
    %cst_14 = arith.constant dense<0.000000e+00> : vector<8xf32>
    %22 = vector.multi_reduction <add>, %21, %cst_14 [1] : vector<8x8xf32> to vector<8xf32>
    %23 = vector.shape_cast %22 : vector<8xf32> to vector<8x1xf32>
    %24 = vector.broadcast %23 : vector<8x1xf32> to vector<8x8xf32>
    %25 = arith.divf %21, %24 : vector<8x8xf32>
    %cst_15 = arith.constant dense<0.000000e+00> : vector<8x32xf32>
    %26 = tpu.matmul %25, %7, %cst_15 {dimension_numbers = #tpu.dot_dimension_numbers<[1], [0], [0], [1], [0, 0, 1, 1], [], []>} : vector<8x8xf32>, vector<8x32xf32>, vector<8x32xf32> -> vector<8x32xf32>
    %c0_16 = arith.constant 0 : index
    %c0_17 = arith.constant 0 : index
    %c0_18 = arith.constant 0 : index
    %27 = vector.load %arg5[%c0_16, %c0_17, %c0_18] : memref<1x8x32xf32, #tpu.memory_space<vmem>>, vector<1x8x32xf32>
    %28 = vector.shape_cast %27 : vector<1x8x32xf32> to vector<8x32xf32>
    %29 = vector.shape_cast %26 : vector<8x32xf32> to vector<1x8x32xf32>
    tpu.vector_store %arg5[%c0_16, %c0_17, %c0_18], %29 {strides = array<i32>} : memref<1x8x32xf32, #tpu.memory_space<vmem>>, vector<1x8x32xf32>,
    return
  }
  func.func @transform_0(%arg0: i32) -> (i32, i32, i32) {
    %c0_i32 = arith.constant 0 : i32
    %c0_i32_0 = arith.constant 0 : i32
    %c0_i32_1 = arith.constant 0 : i32
    return %arg0, %c0_i32, %c0_i32_0 : i32, i32, i32
  }
  func.func @transform_1(%arg0: i32) -> (i32, i32) {
    %c0_i32 = arith.constant 0 : i32
    %c0_i32_0 = arith.constant 0 : i32
    %c0_i32_1 = arith.constant 0 : i32
    return %c0_i32, %c0_i32_0 : i32, i32
  }
  func.func @transform_2(%arg0: i32) -> (i32, i32) {
    %c0_i32 = arith.constant 0 : i32
    %c0_i32_0 = arith.constant 0 : i32
    %c0_i32_1 = arith.constant 0 : i32
    return %c0_i32, %c0_i32_0 : i32, i32
  }
  func.func @transform_3(%arg0: i32) -> (i32, i32) {
    %c0_i32 = arith.constant 0 : i32
    %c0_i32_0 = arith.constant 0 : i32
    %c0_i32_1 = arith.constant 0 : i32
    return %c0_i32, %c0_i32_0 : i32, i32
  }
  func.func @transform_4(%arg0: i32) -> (i32, i32, i32) {
    %c0_i32 = arith.constant 0 : i32
    %c0_i32_0 = arith.constant 0 : i32
    %c0_i32_1 = arith.constant 0 : i32
    return %arg0, %c0_i32, %c0_i32_0 : i32, i32, i32
  }
}

</mosaic_0001>

<llo_original>
// kernel: head_pallas.1
$region0: #{head_pallas.1}
  #allocation0 [shape = 'u32[]', space=smem, size = 0x4, offset = 0x4, fixed_abs, tag = 'smem constant byte address 0x4 - core index']
  #allocation1 [shape = 'u32[72,128]{1,0:T(1,128)}', space=vmem, size = 0x9000, scoped, tag = 'internal scratch']
  %s0 = inlined_call_operand.vmem [shape: f32[2,8,128], index: 0, kind: input, shape index: {}]
  %s1 = inlined_call_operand.vmem [shape: f32[128,32], index: 1, kind: input, shape index: {}]
  %s2 = inlined_call_operand.vmem [shape: f32[128,32], index: 2, kind: input, shape index: {}]
  %s3 = inlined_call_operand.vmem [shape: f32[128,32], index: 3, kind: input, shape index: {}]
  %s4 = inlined_call_operand.hbm [shape: f32[2,8,32], index: 4, kind: output, shape index: {}]
  %s5 = sld [smem:[#allocation0]]
  $region49: #{head_pallas.1} parent=0
    _
  %s7 = ssub.s32 1, %s5
  %s8 = scalar_select 0, %s7, %s5
  $region1: #{head_pallas.1} parent=0
    #allocation2 [shape = 'u8[8192]{0}', space=vmem, size = 0x2000, scoped, tag = 'output window, operand 0']
    #allocation3 [shape = 's32[2]{0}', space=sflag, size = 0x8, scoped, tag = 'scoped memory for head_pallas.1']
    %9 = vsyncpa [#allocation3], 0
    %s10 = scalar_lea.sflag [#allocation3], 1
    %11 = vsyncpa %s10, 0
    loop: start=0, step=1, limit=4
    $region2: #{head_pallas.1} parent=1 // loop_pre_header
      _
    $region3: #{head_pallas.1} parent=1 // loop_header
      %s13 = sphi 0, %s17
      %p14 = scmp.ge.s32.totalorder %s13, 4
      %s23 = sphi 0, %s25
      %s26 = sphi 0, %s23
      %s27 = sphi 0, %s26
      %s43 = sphi 0, %s27
      %s47 = sphi 0, %s47
      %s49 = sphi 0, %s47
      %s50 = sphi 0, %s49
      %s64 = sphi 0, %s50
      %s68 = sphi 0, %s68
      %s70 = sphi 0, %s68
      %s71 = sphi 0, %s70
      %s85 = sphi 0, %s71
      %s89 = sphi 0, %s89
      %s91 = sphi 0, %s89
      %s92 = sphi 0, %s91
      %s106 = sphi 0, %s92
      %s112 = sphi 0, %s114
      %s115 = sphi 0, %s112
      %s116 = sphi 0, %s115
      %s132 = sphi 0, %s116
    $region4: #{head_pallas.1} parent=1 // loop_header_branch
      %16 = sbr.rel (%p14) target = $region8
    $region5: #{head_pallas.1} parent=1 // loop_body
      %s18 = ssub.s32 %s13, 1
      %s19 = ssub.s32 %s13, 2
      %s20 = sadd.s32 %s13, 1
      %s21 = ssub.s32 %s13, %s20
      %p22 = scmp.eq.s32.totalorder %s21, 0
      %s24 = sadd.s32 %s23, 1
      %s25 = scalar_select %p22, %s23, %s24
      %p28 = pneg %p22
      %p29 = scmp.eq.s32.totalorder %s13, 1
      %p30 = por %p28, %p29
      %p31 = scmp.ne.s32.totalorder %s23, %s26
      %p32 = scmp.eq.s32.totalorder %s13, 0
      %p33 = por %p31, %p32
      %p34 = scmp.ne.s32.totalorder %s23, %s26
      %p35 = scmp.eq.s32.totalorder %s18, 1
      %p36 = por %p34, %p35
      %p37 = scmp.ne.s32.totalorder %s26, %s27
      %p38 = scmp.eq.s32.totalorder %s18, 0
      %p39 = por %p37, %p38
      %p40 = scmp.ne.s32.totalorder %s26, %s27
      %p41 = scmp.eq.s32.totalorder %s19, 1
      %p42 = por %p40, %p41
      %p44 = scmp.ne.s32.totalorder %s27, %s43
      %p45 = scmp.eq.s32.totalorder %s19, 0
      %p46 = por %p44, %p45
      %s48 = sadd.s32 %s47, 1
      %p51 = scmp.eq.s32.totalorder %s13, 1
      %p52 = scmp.ne.s32.totalorder %s47, %s49
      %p53 = scmp.eq.s32.totalorder %s13, 0
      %p54 = por %p52, %p53
      %p55 = scmp.ne.s32.totalorder %s47, %s49
      %p56 = scmp.eq.s32.totalorder %s18, 1
      %p57 = por %p55, %p56
      %p58 = scmp.ne.s32.totalorder %s49, %s50
      %p59 = scmp.eq.s32.totalorder %s18, 0
      %p60 = por %p58, %p59
      %p61 = scmp.ne.s32.totalorder %s49, %s50
      %p62 = scmp.eq.s32.totalorder %s19, 1
      %p63 = por %p61, %p62
      %p65 = scmp.ne.s32.totalorder %s50, %s64
      %p66 = scmp.eq.s32.totalorder %s19, 0
      %p67 = por %p65, %p66
      %s69 = sadd.s32 %s68, 1
      %p72 = scmp.eq.s32.totalorder %s13, 1
      %p73 = scmp.ne.s32.totalorder %s68, %s70
      %p74 = scmp.eq.s32.totalorder %s13, 0
      %p75 = por %p73, %p74
      %p76 = scmp.ne.s32.totalorder %s68, %s70
      %p77 = scmp.eq.s32.totalorder %s18, 1
      %p78 = por %p76, %p77
      %p79 = scmp.ne.s32.totalorder %s70, %s71
      %p80 = scmp.eq.s32.totalorder %s18, 0
      %p81 = por %p79, %p80
      %p82 = scmp.ne.s32.totalorder %s70, %s71
      %p83 = scmp.eq.s32.totalorder %s19, 1
      %p84 = por %p82, %p83
      %p86 = scmp.ne.s32.totalorder %s71, %s85
      %p87 = scmp.eq.s32.totalorder %s19, 0
      %p88 = por %p86, %p87
      %s90 = sadd.s32 %s89, 1
      %p93 = scmp.eq.s32.totalorder %s13, 1
      %p94 = scmp.ne.s32.totalorder %s89, %s91
      %p95 = scmp.eq.s32.totalorder %s13, 0
      %p96 = por %p94, %p95
      %p97 = scmp.ne.s32.totalorder %s89, %s91
      %p98 = scmp.eq.s32.totalorder %s18, 1
      %p99 = por %p97, %p98
      %p100 = scmp.ne.s32.totalorder %s91, %s92
      %p101 = scmp.eq.s32.totalorder %s18, 0
      %p102 = por %p100, %p101
      %p103 = scmp.ne.s32.totalorder %s91, %s92
      %p104 = scmp.eq.s32.totalorder %s19, 1
      %p105 = por %p103, %p104
      %p107 = scmp.ne.s32.totalorder %s92, %s106
      %p108 = scmp.eq.s32.totalorder %s19, 0
      %p109 = por %p107, %p108
      %s110 = ssub.s32 %s13, %s20
      %p111 = scmp.eq.s32.totalorder %s110, 0
      %s113 = sadd.s32 %s112, 1
      %s114 = scalar_select %p111, %s112, %s113
      %p117 = pneg %p111
      %p118 = scmp.eq.s32.totalorder %s13, 1
      %p119 = por %p117, %p118
      %p120 = scmp.ne.s32.totalorder %s112, %s115
      %p121 = scmp.eq.s32.totalorder %s13, 0
      %p122 = por %p120, %p121
      %p123 = scmp.ne.s32.totalorder %s112, %s115
      %p124 = scmp.eq.s32.totalorder %s18, 1
      %p125 = por %p123, %p124
      %p126 = scmp.ne.s32.totalorder %s115, %s116
      %p127 = scmp.eq.s32.totalorder %s18, 0
      %p128 = por %p126, %p127
      %p129 = scmp.ne.s32.totalorder %s115, %s116
      %p130 = scmp.eq.s32.totalorder %s19, 1
      %p131 = por %p129, %p130
      %p133 = scmp.ne.s32.totalorder %s116, %s132
      %p134 = scmp.eq.s32.totalorder %s19, 0
      %p135 = por %p133, %p134
      %p136 = scmp.le.s32.totalorder 1, %s13
      %p137 = scmp.lt.s32.totalorder %s13, 3
      %p138 = pnand %p136, %p137
      %p139 = pneg %p138
      // Predicated region
      $region9: #{head_pallas.1} parent=5 // pred_check
        _
      $region10: #{head_pallas.1} parent=5 // pred_check_branch
        %141 = sbr.rel (%p138) target = $region12
      $region11: #{head_pallas.1} parent=5 // pred_region
        %s142 = ssub.s32 %s13, 1
        // Predicated region
        $region13: #{head_pallas.1} parent=11 // pred_check
          %p143 = pneg %p60
        $region14: #{head_pallas.1} parent=11 // pred_check_branch
          %145 = sbr.rel (%p143) target = $region16
        $region15: #{head_pallas.1} parent=11 // pred_region
          _
        $region16: #{head_pallas.1} parent=11 // pred_fallthru
          _
        // Predicated region
        $region17: #{head_pallas.1} parent=11 // pred_check
          %p146 = pneg %p81
        $region18: #{head_pallas.1} parent=11 // pred_check_branch
          %148 = sbr.rel (%p146) target = $region20
        $region19: #{head_pallas.1} parent=11 // pred_region
          _
        $region20: #{head_pallas.1} parent=11 // pred_fallthru
          _
        // Predicated region
        $region21: #{head_pallas.1} parent=11 // pred_check
          %p149 = pneg %p102
        $region22: #{head_pallas.1} parent=11 // pred_check_branch
          %151 = sbr.rel (%p149) target = $region24
        $region23: #{head_pallas.1} parent=11 // pred_region
          _
        $region24: #{head_pallas.1} parent=11 // pred_fallthru
          _
      $region12: #{head_pallas.1} parent=5 // pred_fallthru
        _
      %p152 = scmp.lt.s32.totalorder %s13, 2
      // Predicated region
      $region25: #{head_pallas.1} parent=5 // pred_check
        %p153 = pneg %p152
      $region26: #{head_pallas.1} parent=5 // pred_check_branch
        %155 = sbr.rel (%p153) target = $region28
      $region27: #{head_pallas.1} parent=5 // pred_region
        // Predicated region
        $region29: #{head_pallas.1} parent=27 // pred_check
          %p156 = pneg %p33
        $region30: #{head_pallas.1} parent=27 // pred_check_branch
          %158 = sbr.rel (%p156) target = $region32
        $region31: #{head_pallas.1} parent=27 // pred_region
          %p159 = scmp.lt.s32.totalorder %s13, 1
          %s160 = scalar_select %p159, %s13, 1
          %s161 = smul.addr %s160, 8
          %s162 = scalar_lea.vmem %s0, %s161
        $region32: #{head_pallas.1} parent=27 // pred_fallthru
          _
      $region28: #{head_pallas.1} parent=5 // pred_fallthru
        _
      %p163 = scmp.le.s32.totalorder 1, %s13
      %p164 = scmp.lt.s32.totalorder %s13, 3
      %p165 = pnand %p163, %p164
      %p166 = pneg %p165
      // Predicated region
      $region33: #{head_pallas.1} parent=5 // pred_check
        _
      $region34: #{head_pallas.1} parent=5 // pred_check_branch
        %168 = sbr.rel (%p165) target = $region36
      $region35: #{head_pallas.1} parent=5 // pred_region
        %s169 = ssub.s32 %s13, 1
        %p170 = scmp.lt.s32.totalorder %s18, 1
        %s171 = scalar_select %p170, %s18, 1
        %s172 = smul.addr %s171, 8
        %s173 = scalar_lea.vmem %s0, %s172
        %p174 = pneg %p39
        %p175 = pneg %p36
        %p176 = pneg %p60
        %p177 = pneg %p57
        %p178 = pneg %p81
        %p179 = pneg %p78
        %p180 = pneg %p102
        %p181 = pneg %p99
        %p182 = pneg %p128
        %p183 = pneg %p125
        %s184 = sand.u32 %s115, 1
        %s185 = scalar_lea.sflag [#allocation3], %s184
        %s186 = sand.u32 %s115, 1
        %s187 = smul.addr %s186, 8
        %s188 = scalar_lea.vmem [#allocation2], %s187
        %p189 = scmp.lt.s32.totalorder %s18, 1
        %s190 = scalar_select %p189, %s18, 1
        %s191 = smul.addr %s190, 8
        %s192 = scalar_lea.vmem %s0, %s191
        %v193 = vld [vmem:[%s192] sm:$0xff]
        %v194 = vld [vmem:[%s1] sm:$0xff]
        %v195 = vld [vmem:[%s1 + $0x8] sm:$0xff]
        %v196 = vld [vmem:[%s1 + $0x10] sm:$0xff]
        %v197 = vld [vmem:[%s1 + $0x18] sm:$0xff]
        %v198 = vld [vmem:[%s1 + $0x20] sm:$0xff]
        %v199 = vld [vmem:[%s1 + $0x28] sm:$0xff]
        %v200 = vld [vmem:[%s1 + $0x30] sm:$0xff]
        %v201 = vld [vmem:[%s1 + $0x38] sm:$0xff]
        %v202 = vld [vmem:[%s1 + $0x40] sm:$0xff]
        %v203 = vld [vmem:[%s1 + $0x48] sm:$0xff]
        %v204 = vld [vmem:[%s1 + $0x50] sm:$0xff]
        %v205 = vld [vmem:[%s1 + $0x58] sm:$0xff]
        %v206 = vld [vmem:[%s1 + $0x60] sm:$0xff]
        %v207 = vld [vmem:[%s1 + $0x68] sm:$0xff]
        %v208 = vld [vmem:[%s1 + $0x70] sm:$0xff]
        %v209 = vld [vmem:[%s1 + $0x78] sm:$0xff]
        %210 = vmatpush.msra.mxu0 %v209
        %211 = vmatpush.msra.mxu0 %v208
        %212 = vmatpush.msra.mxu0 %v207
        %213 = vmatpush.msra.mxu0 %v206
        %214 = vmatpush.msra.mxu0 %v205
        %215 = vmatpush.msra.mxu0 %v204
        %216 = vmatpush.msra.mxu0 %v203
        %217 = vmatpush.msra.mxu0 %v202
        %218 = vmatpush.msra.mxu0 %v201
        %219 = vmatpush.msra.mxu0 %v200
        %220 = vmatpush.msra.mxu0 %v199
        %221 = vmatpush.msra.mxu0 %v198
        %222 = vmatpush.msra.mxu0 %v197
        %223 = vmatpush.msra.mxu0 %v196
        %224 = vmatpush.msra.mxu0 %v195
        %225 = vmatpush.msra.mxu0 %v194
        %226 = vmatmul.f32.gmra.mxu0 %v193
        %v227 = vpop.f32.mrf.mxu0
        %v228 = vadd.f32 0.0, %v227
        %229 = vdwg.mxu0
        %v230 = vld [vmem:[%s2] sm:$0xff]
        %v231 = vld [vmem:[%s2 + $0x8] sm:$0xff]
        %v232 = vld [vmem:[%s2 + $0x10] sm:$0xff]
        %v233 = vld [vmem:[%s2 + $0x18] sm:$0xff]
        %v234 = vld [vmem:[%s2 + $0x20] sm:$0xff]
        %v235 = vld [vmem:[%s2 + $0x28] sm:$0xff]
        %v236 = vld [vmem:[%s2 + $0x30] sm:$0xff]
        %v237 = vld [vmem:[%s2 + $0x38] sm:$0xff]
        %v238 = vld [vmem:[%s2 + $0x40] sm:$0xff]
        %v239 = vld [vmem:[%s2 + $0x48] sm:$0xff]
        %v240 = vld [vmem:[%s2 + $0x50] sm:$0xff]
        %v241 = vld [vmem:[%s2 + $0x58] sm:$0xff]
        %v242 = vld [vmem:[%s2 + $0x60] sm:$0xff]
        %v243 = vld [vmem:[%s2 + $0x68] sm:$0xff]
        %v244 = vld [vmem:[%s2 + $0x70] sm:$0xff]
        %v245 = vld [vmem:[%s2 + $0x78] sm:$0xff]
        %246 = vmatpush.msra.mxu0 %v245
        %247 = vmatpush.msra.mxu0 %v244
        %248 = vmatpush.msra.mxu0 %v243
        %249 = vmatpush.msra.mxu0 %v242
        %250 = vmatpush.msra.mxu0 %v241
        %251 = vmatpush.msra.mxu0 %v240
        %252 = vmatpush.msra.mxu0 %v239
        %253 = vmatpush.msra.mxu0 %v238
        %254 = vmatpush.msra.mxu0 %v237
        %255 = vmatpush.msra.mxu0 %v236
        %256 = vmatpush.msra.mxu0 %v235
        %257 = vmatpush.msra.mxu0 %v234
        %258 = vmatpush.msra.mxu0 %v233
        %259 = vmatpush.msra.mxu0 %v232
        %260 = vmatpush.msra.mxu0 %v231
        %261 = vmatpush.msra.mxu0 %v230
        %262 = vmatmul.f32.gmra.mxu0 %v193
        %v263 = vpop.f32.mrf.mxu0
        %v264 = vadd.f32 0.0, %v263
        %265 = vdwg.mxu0
        %v266 = vld [vmem:[%s3] sm:$0xff]
        %v267 = vld [vmem:[%s3 + $0x8] sm:$0xff]
        %v268 = vld [vmem:[%s3 + $0x10] sm:$0xff]
        %v269 = vld [vmem:[%s3 + $0x18] sm:$0xff]
        %v270 = vld [vmem:[%s3 + $0x20] sm:$0xff]
        %v271 = vld [vmem:[%s3 + $0x28] sm:$0xff]
        %v272 = vld [vmem:[%s3 + $0x30] sm:$0xff]
        %v273 = vld [vmem:[%s3 + $0x38] sm:$0xff]
        %v274 = vld [vmem:[%s3 + $0x40] sm:$0xff]
        %v275 = vld [vmem:[%s3 + $0x48] sm:$0xff]
        %v276 = vld [vmem:[%s3 + $0x50] sm:$0xff]
        %v277 = vld [vmem:[%s3 + $0x58] sm:$0xff]
        %v278 = vld [vmem:[%s3 + $0x60] sm:$0xff]
        %v279 = vld [vmem:[%s3 + $0x68] sm:$0xff]
        %v280 = vld [vmem:[%s3 + $0x70] sm:$0xff]
        %v281 = vld [vmem:[%s3 + $0x78] sm:$0xff]
        %282 = vmatpush.msra.mxu0 %v281
        %283 = vmatpush.msra.mxu0 %v280
        %284 = vmatpush.msra.mxu0 %v279
        %285 = vmatpush.msra.mxu0 %v278
        %286 = vmatpush.msra.mxu0 %v277
        %287 = vmatpush.msra.mxu0 %v276
        %288 = vmatpush.msra.mxu0 %v275
        %289 = vmatpush.msra.mxu0 %v274
        %290 = vmatpush.msra.mxu0 %v273
        %291 = vmatpush.msra.mxu0 %v272
        %292 = vmatpush.msra.mxu0 %v271
        %293 = vmatpush.msra.mxu0 %v270
        %294 = vmatpush.msra.mxu0 %v269
        %295 = vmatpush.msra.mxu0 %v268
        %296 = vmatpush.msra.mxu0 %v267
        %297 = vmatpush.msra.mxu0 %v266
        %298 = vmatmul.f32.gmra.mxu0 %v193
        %v299 = vpop.f32.mrf.mxu0
        %v300 = vadd.f32 0.0, %v299
        %301 = vdwg.mxu0
        %vm302 = vcmask 261120
        %v304 = vsel %vm302, %v228, 0
        %v307 = vsel %vm302, %v264, 0
        %309 = vmatpush.xpose.msra.mxu0 0.0
        %310 = vmatpush.xpose.msra.mxu0 0.0
        %311 = vmatpush.xpose.msra.mxu0 0.0
        %312 = vmatpush.xpose.msra.mxu0 0.0
        %313 = vmatpush.xpose.msra.mxu0 0.0
        %314 = vmatpush.xpose.msra.mxu0 0.0
        %315 = vmatpush.xpose.msra.mxu0 0.0
        %316 = vmatpush.xpose.msra.mxu0 0.0
        %317 = vmatpush.xpose.msra.mxu0 0.0
        %318 = vmatpush.xpose.msra.mxu0 0.0
        %319 = vmatpush.xpose.msra.mxu0 0.0
        %320 = vmatpush.xpose.msra.mxu0 0.0
        %321 = vmatpush.xpose.msra.mxu0 0.0
        %322 = vmatpush.xpose.msra.mxu0 0.0
        %323 = vmatpush.xpose.msra.mxu0 0.0
        %324 = vmatpush.xpose.msra.mxu0 %v307
        %325 = vmatmul.f32.gmra.mxu0 %v304
        %v326 = vpop.f32.mrf.mxu0
        %v327 = vadd.f32 0.0, %v326
        %328 = vdwg.mxu0
        %v329 = vmul.f32 %v327, 0.17677669
        %v330 = vlaneseq
        %v331 = vshrl.u32 %v330, 7
        %v332 = vlaneseq
        %v333 = vand.u32 %v332, 127
        %vm334 = vcmp.le.s32.totalorder %v333, %v331
        %v335 = vsel %vm334, %v329, -inf
        %vm336 = vcmask 64512
        %v337 = vsel %vm336, %v335, -inf
        %338 = vmax.xlane.f32.xlu0 %v337
        %v339 = vpop.xlane.xlu0 %338
        %v340 = vsub.f32 %v335, %v339
        %v341 = vmul.f32 %v340, 1.442695
        %v342 = vpow.pop %v341
        %v343 = vsel %vm336, %v342, 0.0
        %344 = vadd.xlane.f32.xlu0 %v343
        %v345 = vpop.xlane.xlu0 %344
        %v346 = vrcp.pop %v345
        %v347 = vmul.f32 %v345, %v346
        %v348 = vsub.f32 1.0, %v347
        %v349 = vmul.f32 %v346, %v348
        %v350 = vadd.f32 %v346, %v349
        %vm351 = vweird.f32 %v345
        %vm352 = vweird.f32 %v346
        %vm353 = vmor %vm351, %vm352
        %v354 = vsel %vm353, %v346, %v350
        %v355 = vand.u32 2147483647, %v345
        %vm356 = vcmp.eq.f32.partialorder %v355, 8.507059e+37
        %v357 = vand.u32 %v345, 2147483648
        %v358 = vor.u32 1.1754944e-38, %v357
        %v359 = vsel %vm356, %v358, %v354
        %v360 = vmul.f32 %v342, %v359
        %v362 = vsel %vm336, %v360, 0
        %364 = vmatpush.msra.mxu0 0.0
        %365 = vmatpush.msra.mxu0 0.0
        %366 = vmatpush.msra.mxu0 0.0
        %367 = vmatpush.msra.mxu0 0.0
        %368 = vmatpush.msra.mxu0 0.0
        %369 = vmatpush.msra.mxu0 0.0
        %370 = vmatpush.msra.mxu0 0.0
        %371 = vmatpush.msra.mxu0 0.0
        %372 = vmatpush.msra.mxu0 0.0
        %373 = vmatpush.msra.mxu0 0.0
        %374 = vmatpush.msra.mxu0 0.0
        %375 = vmatpush.msra.mxu0 0.0
        %376 = vmatpush.msra.mxu0 0.0
        %377 = vmatpush.msra.mxu0 0.0
        %378 = vmatpush.msra.mxu0 0.0
        %379 = vmatpush.msra.mxu0 %v300
        %380 = vmatmul.f32.gmra.mxu0 %v362
        %v381 = vpop.f32.mrf.mxu0
        %v382 = vadd.f32 0.0, %v381
        %383 = vdwg.mxu0
        %384 = vst.msk [vmem:[%s188] sm:$0xff] %vm302, %v382
        %s385 = sand.u32 %s115, 1
        %s386 = scalar_lea.sflag [#allocation3], %s385
        %s387 = sand.u32 %s115, 1
        %s388 = smul.addr %s387, 8
        %s389 = scalar_lea.vmem [#allocation2], %s388
        // Predicated region
        $region37: #{head_pallas.1} parent=35 // pred_check
          %p390 = pneg %p125
        $region38: #{head_pallas.1} parent=35 // pred_check_branch
          %392 = sbr.rel (%p390) target = $region40
        $region39: #{head_pallas.1} parent=35 // pred_region
          %394 = vsyncadd %s386, 0
          %s395 = smul.addr %s18, 8
          %s396 = scalar_lea.hbm %s4, %s395
          %s398 = sshll.u32 %s389, 4
          %s399 = int_to_ptr.vmem [resolvable:$true] %s398
          %s400 = sshll.u32 %s396, 4
          %s401 = int_to_ptr.hbm [resolvable:$true] %s400
          %403 = dma.vmem_to_hbm [thread:$0]  %s399, 128, %s401, %s386
        $region40: #{head_pallas.1} parent=35 // pred_fallthru
          _
      $region36: #{head_pallas.1} parent=5 // pred_fallthru
        _
      %p404 = scmp.le.s32.totalorder 2, %s13
      // Predicated region
      $region41: #{head_pallas.1} parent=5 // pred_check
        %p405 = pneg %p404
      $region42: #{head_pallas.1} parent=5 // pred_check_branch
        %407 = sbr.rel (%p405) target = $region44
      $region43: #{head_pallas.1} parent=5 // pred_region
        %s408 = ssub.s32 %s13, 2
        // Predicated region
        $region45: #{head_pallas.1} parent=43 // pred_check
          %p409 = pneg %p131
        $region46: #{head_pallas.1} parent=43 // pred_check_branch
          %411 = sbr.rel (%p409) target = $region48
        $region47: #{head_pallas.1} parent=43 // pred_region
          %s412 = sand.u32 %s116, 1
          %s413 = scalar_lea.sflag [#allocation3], %s412
          %s414 = sand.u32 %s116, 1
          %s415 = smul.addr %s414, 8
          %s416 = scalar_lea.vmem [#allocation2], %s415
          %418 = dma.done %s413, 128
        $region48: #{head_pallas.1} parent=43 // pred_fallthru
          _
      $region44: #{head_pallas.1} parent=5 // pred_fallthru
        _
    $region6: #{head_pallas.1} parent=1 // loop_footer
      %s17 = sadd.s32 1, %s13
    $region7: #{head_pallas.1} parent=1 // loop_footer_branch
      %12 = sbr.rel target = $region3
    $region8: #{head_pallas.1} parent=1 // loop_exit
      _
    %419 = vsyncpa [#allocation3], 1
    %s420 = scalar_lea.sflag [#allocation3], 1
    %421 = vsyncpa %s420, 1

</llo_original>
